<compile_context>
chip_gen: v7x
topology: tpu7x:2x2x1
jax: 0.10.0
libtpu: 0.0.40
codegen_flags: <defaults>
</compile_context>

<pallas_src>
from typing import NamedTuple

import jax
import jax.numpy as jnp
from jax.experimental import pallas as pl
from jax.experimental.pallas import tpu as pltpu

_FEAT_PER_CH = 9        # 3 * 3 spatial positions
_FEAT = 2 * _FEAT_PER_CH
_LANE = 128
_MAX_TILE = 2048        # ~10 MiB/step (in/out double buffers + temporaries)


def _round_up(n, m):
    return ((n + m - 1) // m) * m


class PreparedNet(NamedTuple):
    """Kernel-ready parameters (built once by prepare_params, reused forever)."""
    conv_w: jax.Array   # (4,)  [w00, w01, w10, w11]  -> SMEM scalars
    conv_b: jax.Array   # (2,)                        -> SMEM scalars
    w1a: jax.Array      # (9, Hp)  fc1_w^T rows for conv-out-channel-0 pixels
    w1b: jax.Array      # (9, Hp)  fc1_w^T rows for conv-out-channel-1 pixels
    b1: jax.Array       # (1, Hp)
    w2: jax.Array       # (Hp, A)  fc2_w^T (hidden zero-padded, actions NOT padded)
    b2: jax.Array       # (1, A)


def prepare_params(params):
    """One-time preprocessing of PyTorch-layout params. NOT in the hot path."""
    f32 = jnp.float32
    conv_w = params["conv_w"].astype(f32).reshape(4)      # (2,2,1,1) -> [w00,w01,w10,w11]
    conv_b = params["conv_b"].astype(f32)                 # (2,)

    w1 = params["fc1_w"].astype(f32)                      # (H, 18)
    b1 = params["fc1_b"].astype(f32)                      # (H,)
    w2 = params["fc2_w"].astype(f32)                      # (A, H)
    b2 = params["fc2_b"].astype(f32)                      # (A,)

    hidden = w1.shape[0]
    num_actions = w2.shape[0]
    hp = _round_up(hidden, _LANE)

    # Zero-pad the (internal) hidden axis only: padded hidden units stay 0
    # through ReLU and their fc2 rows are 0, so results are unaffected.
    # The action axis is left at its true width (narrow, unpadded output).
    w1t = jnp.zeros((_FEAT, hp), f32).at[:, :hidden].set(w1.T)
    b1p = jnp.zeros((1, hp), f32).at[:, :hidden].set(b1[None, :])
    w2t = jnp.zeros((hp, num_actions), f32).at[:hidden, :].set(w2.T)
    b2r = b2[None, :]

    return PreparedNet(conv_w=conv_w, conv_b=conv_b,
                       w1a=w1t[:_FEAT_PER_CH], w1b=w1t[_FEAT_PER_CH:],
                       b1=b1p, w2=w2t, b2=b2r)


def net_kernel(x_ref, cw_ref, cb_ref, w1a_ref, w1b_ref, b1_ref, w2_ref, b2_ref,
               o_ref):
    # x_ref: (Bt, 18) channel-major (NCHW) flattened input block.
    x = x_ref[...]
    x0 = x[:, :_FEAT_PER_CH]                    # input channel 0 (9 pixels)
    x1 = x[:, _FEAT_PER_CH:_FEAT]               # input channel 1 (9 pixels)

    # 1x1 conv + ReLU as a VPU channel mix with SMEM scalars (no MXU pass).
    r0 = jnp.maximum(cw_ref[0] * x0 + cw_ref[1] * x1 + cb_ref[0], 0.0)
    r1 = jnp.maximum(cw_ref[2] * x0 + cw_ref[3] * x1 + cb_ref[1], 0.0)

    # fc1 + ReLU: split-K matmul against the two halves of fc1_w^T, so r0/r1
    # never need to be re-concatenated / rolled on the lane axis.
    h = jnp.dot(r0, w1a_ref[...], preferred_element_type=jnp.float32)
    h = h + jnp.dot(r1, w1b_ref[...], preferred_element_type=jnp.float32)
    h = jnp.maximum(h + b1_ref[...], 0.0)

    # fc2 straight into the narrow (Bt, num_actions) output block: only the
    # useful 16 B/row ever leave VMEM (no 128-lane padding, no wrapper slice).
    q = jnp.dot(h, w2_ref[...], preferred_element_type=jnp.float32) + b2_ref[...]
    o_ref[...] = q.astype(o_ref.dtype)


def _num_tensorcores():
    """Best-effort TC count; defaults to 1 (v5e/v6e). Megacore parts that
    expose a core count get >=2 so medium batches split across TensorCores."""
    try:
        return max(1, int(getattr(jax.devices()[0], "num_cores", 1)))
    except Exception:
        return 1


def _batch_tile(batch, num_cores):
    """Single tile on 1-TC parts; even split on multi-TC parts; large bounded
    tiles for big batches (per-step overhead amortized, VMEM bounded for v7x)."""
    if batch > _MAX_TILE:
        return _MAX_TILE
    if num_cores > 1 and batch >= 256:
        part = _round_up(pl.cdiv(batch, num_cores), 8)
        if part < batch:
            return part
    return batch


def net_forward(x_nchw, p: PreparedNet):
    """Q-values for a batch of (2, 3, 3) NCHW states. Returns (B, num_actions)."""
    batch = x_nchw.shape[0]
    x_flat = x_nchw.reshape(batch, _FEAT).astype(jnp.float32)  # channel-major flatten

    hp = p.w1a.shape[1]
    num_actions = p.w2.shape[1]
    bt = _batch_tile(batch, _num_tensorcores())
    grid = (pl.cdiv(batch, bt),)

    cp = dict(dimension_semantics=("parallel",))
    if bt >= 1024:
        # Raise v5e's 16 MiB scoped-VMEM default for the big tile; 32 MiB is
        # within physical VMEM on v5e/v6e (128 MiB) and v7x (64 MiB).
        cp["vmem_limit_bytes"] = 32 * 1024 * 1024

    smem = pltpu.MemorySpace.SMEM
    return pl.pallas_call(
        net_kernel,
        out_shape=jax.ShapeDtypeStruct((batch, num_actions), jnp.float32),
        grid=grid,
        in_specs=[
            pl.BlockSpec((bt, _FEAT), lambda i: (i, 0)),                 # x block
            pl.BlockSpec((4,), lambda i: (0,), memory_space=smem),       # conv weight
            pl.BlockSpec((2,), lambda i: (0,), memory_space=smem),       # conv bias
            pl.BlockSpec((_FEAT_PER_CH, hp), lambda i: (0, 0)),          # w1a
            pl.BlockSpec((_FEAT_PER_CH, hp), lambda i: (0, 0)),          # w1b
            pl.BlockSpec((1, hp), lambda i: (0, 0)),                     # b1
            pl.BlockSpec((hp, num_actions), lambda i: (0, 0)),           # w2 (narrow)
            pl.BlockSpec((1, num_actions), lambda i: (0, 0)),            # b2 (narrow)
        ],
        out_specs=pl.BlockSpec((bt, num_actions), lambda i: (i, 0)),
        compiler_params=pltpu.CompilerParams(**cp),
    )(x_flat, p.conv_w, p.conv_b, p.w1a, p.w1b, p.b1, p.w2, p.b2)


def init_params(key, num_actions=4, hidden_layer_size=128):
    """Deterministic synthetic parameters matching the nn.Module shapes."""
    ks = jax.random.split(key, 6)
    return {
        # Conv2d(2, 2, kernel_size=1): weight (2, 2, 1, 1), bias (2,)
        "conv_w": 0.3 * jax.random.normal(ks[0], (2, 2, 1, 1), jnp.float32),
        "conv_b": 0.1 * jax.random.normal(ks[1], (2,), jnp.float32),
        # Linear(18, hidden)
        "fc1_w": 0.1 * jax.random.normal(ks[2], (hidden_layer_size, 18), jnp.float32),
        "fc1_b": 0.1 * jax.random.normal(ks[3], (hidden_layer_size,), jnp.float32),
        # Linear(hidden, num_actions)
        "fc2_w": 0.1 * jax.random.normal(ks[4], (num_actions, hidden_layer_size), jnp.float32),
        "fc2_b": 0.1 * jax.random.normal(ks[5], (num_actions,), jnp.float32),
    }


def net_forward_ref(x_nchw, params):
    """Pure-JAX reference mirroring the PyTorch forward, for validation."""
    wc = params["conv_w"].reshape(2, 2)
    y = jnp.einsum("bchw,oc->bohw", x_nchw, wc) + params["conv_b"][None, :, None, None]
    y = jnp.maximum(y, 0.0)                            # relu(conv1)
    y = y.reshape(y.shape[0], -1)                      # flatten(x, 1)
    h = jnp.maximum(y @ params["fc1_w"].T + params["fc1_b"], 0.0)
    return h @ params["fc2_w"].T + params["fc2_b"]


if __name__ == "__main__":
    key = jax.random.PRNGKey(0)
    k_x, k_p = jax.random.split(key)

    B, num_actions, hidden = 2, 4, 128
    x = jax.random.normal(k_x, (B, 2, 3, 3), jnp.float32)   # NCHW, matches input_state
    params = init_params(k_p, num_actions=num_actions, hidden_layer_size=hidden)

    prep = prepare_params(params)     # one-time parameter preprocessing
    fwd = jax.jit(net_forward)

    q = jax.block_until_ready(fwd(x, prep))
    q_ref = net_forward_ref(x, params)

    assert q.shape == (B, num_actions)
    assert jnp.allclose(q, q_ref, atol=1e-5, rtol=1e-5), "mismatch vs reference"

    print("KERNEL_OK")
</pallas_src>

<mosaic_0001>
module attributes {stable_mosaic.version = 11 : i64} {
  func.func @net_kernel(%arg0: i32, %arg1: memref<2x18xf32, #tpu.memory_space<vmem>>, %arg2: memref<4xf32, #tpu.memory_space<smem>>, %arg3: memref<2xf32, #tpu.memory_space<smem>>, %arg4: memref<9x128xf32, #tpu.memory_space<vmem>>, %arg5: memref<9x128xf32, #tpu.memory_space<vmem>>, %arg6: memref<1x128xf32, #tpu.memory_space<vmem>>, %arg7: memref<128x4xf32, #tpu.memory_space<vmem>>, %arg8: memref<1x4xf32, #tpu.memory_space<vmem>>, %arg9: memref<2x4xf32, #tpu.memory_space<vmem>>) attributes {dimension_semantics = [#tpu.dimension_semantics<parallel>], iteration_bounds = array<i64: 1>, scalar_prefetch = 0 : i64, scratch_operands = 0 : i64, tpu.core_type = #tpu.core_type<tc>, window_params = [{transform_indices = @transform_0, window_bounds = array<i64: 2, 18>}, {transform_indices = @transform_1, window_bounds = array<i64: 4>}, {transform_indices = @transform_2, window_bounds = array<i64: 2>}, {pipeline_mode = #tpu.pipeline_mode<synchronous>, transform_indices = @transform_3, window_bounds = array<i64: 9, 128>}, {pipeline_mode = #tpu.pipeline_mode<synchronous>, transform_indices = @transform_4, window_bounds = array<i64: 9, 128>}, {pipeline_mode = #tpu.pipeline_mode<synchronous>, transform_indices = @transform_5, window_bounds = array<i64: 1, 128>}, {pipeline_mode = #tpu.pipeline_mode<synchronous>, transform_indices = @transform_6, window_bounds = array<i64: 128, 4>}, {pipeline_mode = #tpu.pipeline_mode<synchronous>, transform_indices = @transform_7, window_bounds = array<i64: 1, 4>}, {transform_indices = @transform_8, window_bounds = array<i64: 2, 4>}]} {
    %c0 = arith.constant 0 : index
    %c0_0 = arith.constant 0 : index
    %0 = vector.load %arg1[%c0, %c0_0] : memref<2x18xf32, #tpu.memory_space<vmem>>, vector<2x18xf32>
    %1 = vector.extract_strided_slice %0 {offsets = [0, 0], sizes = [2, 9], strides = [1, 1]} : vector<2x18xf32> to vector<2x9xf32>
    %2 = vector.extract_strided_slice %0 {offsets = [0, 9], sizes = [2, 9], strides = [1, 1]} : vector<2x18xf32> to vector<2x9xf32>
    %c0_1 = arith.constant 0 : index
    %3 = memref.load %arg2[%c0_1] : memref<4xf32, #tpu.memory_space<smem>>
    %4 = vector.broadcast %3 : f32 to vector<2x9xf32>
    %5 = arith.mulf %4, %1 : vector<2x9xf32>
    %c1 = arith.constant 1 : index
    %6 = memref.load %arg2[%c1] : memref<4xf32, #tpu.memory_space<smem>>
    %7 = vector.broadcast %6 : f32 to vector<2x9xf32>
    %8 = arith.mulf %7, %2 : vector<2x9xf32>
    %9 = arith.addf %5, %8 : vector<2x9xf32>
    %c0_2 = arith.constant 0 : index
    %10 = memref.load %arg3[%c0_2] : memref<2xf32, #tpu.memory_space<smem>>
    %11 = vector.broadcast %10 : f32 to vector<2x9xf32>
    %12 = arith.addf %9, %11 : vector<2x9xf32>
    %cst = arith.constant 0.000000e+00 : f32
    %13 = vector.broadcast %cst : f32 to vector<2x9xf32>
    %14 = arith.maximumf %12, %13 : vector<2x9xf32>
    %c2 = arith.constant 2 : index
    %15 = memref.load %arg2[%c2] : memref<4xf32, #tpu.memory_space<smem>>
    %16 = vector.broadcast %15 : f32 to vector<2x9xf32>
    %17 = arith.mulf %16, %1 : vector<2x9xf32>
    %c3 = arith.constant 3 : index
    %18 = memref.load %arg2[%c3] : memref<4xf32, #tpu.memory_space<smem>>
    %19 = vector.broadcast %18 : f32 to vector<2x9xf32>
    %20 = arith.mulf %19, %2 : vector<2x9xf32>
    %21 = arith.addf %17, %20 : vector<2x9xf32>
    %c1_3 = arith.constant 1 : index
    %22 = memref.load %arg3[%c1_3] : memref<2xf32, #tpu.memory_space<smem>>
    %23 = vector.broadcast %22 : f32 to vector<2x9xf32>
    %24 = arith.addf %21, %23 : vector<2x9xf32>
    %cst_4 = arith.constant 0.000000e+00 : f32
    %25 = vector.broadcast %cst_4 : f32 to vector<2x9xf32>
    %26 = arith.maximumf %24, %25 : vector<2x9xf32>
    %c0_5 = arith.constant 0 : index
    %c0_6 = arith.constant 0 : index
    %27 = vector.load %arg4[%c0_5, %c0_6] : memref<9x128xf32, #tpu.memory_space<vmem>>, vector<9x128xf32>
    %cst_7 = arith.constant dense<0.000000e+00> : vector<2x128xf32>
    %28 = tpu.matmul %14, %27, %cst_7 {dimension_numbers = #tpu.dot_dimension_numbers<[1], [0], [0], [1], [0, 0, 1, 1], [], []>} : vector<2x9xf32>, vector<9x128xf32>, vector<2x128xf32> -> vector<2x128xf32>
    %c0_8 = arith.constant 0 : index
    %c0_9 = arith.constant 0 : index
    %29 = vector.load %arg5[%c0_8, %c0_9] : memref<9x128xf32, #tpu.memory_space<vmem>>, vector<9x128xf32>
    %cst_10 = arith.constant dense<0.000000e+00> : vector<2x128xf32>
    %30 = tpu.matmul %26, %29, %cst_10 {dimension_numbers = #tpu.dot_dimension_numbers<[1], [0], [0], [1], [0, 0, 1, 1], [], []>} : vector<2x9xf32>, vector<9x128xf32>, vector<2x128xf32> -> vector<2x128xf32>
    %31 = arith.addf %28, %30 : vector<2x128xf32>
    %c0_11 = arith.constant 0 : index
    %c0_12 = arith.constant 0 : index
    %32 = vector.load %arg6[%c0_11, %c0_12] : memref<1x128xf32, #tpu.memory_space<vmem>>, vector<1x128xf32>
    %33 = vector.broadcast %32 : vector<1x128xf32> to vector<2x128xf32>
    %34 = arith.addf %31, %33 : vector<2x128xf32>
    %cst_13 = arith.constant 0.000000e+00 : f32
    %35 = vector.broadcast %cst_13 : f32 to vector<2x128xf32>
    %36 = arith.maximumf %34, %35 : vector<2x128xf32>
    %c0_14 = arith.constant 0 : index
    %c0_15 = arith.constant 0 : index
    %37 = vector.load %arg7[%c0_14, %c0_15] : memref<128x4xf32, #tpu.memory_space<vmem>>, vector<128x4xf32>
    %cst_16 = arith.constant dense<0.000000e+00> : vector<2x4xf32>
    %38 = tpu.matmul %36, %37, %cst_16 {dimension_numbers = #tpu.dot_dimension_numbers<[1], [0], [0], [1], [0, 0, 1, 1], [], []>} : vector<2x128xf32>, vector<128x4xf32>, vector<2x4xf32> -> vector<2x4xf32>
    %c0_17 = arith.constant 0 : index
    %c0_18 = arith.constant 0 : index
    %39 = vector.load %arg8[%c0_17, %c0_18] : memref<1x4xf32, #tpu.memory_space<vmem>>, vector<1x4xf32>
    %40 = vector.broadcast %39 : vector<1x4xf32> to vector<2x4xf32>
    %41 = arith.addf %38, %40 : vector<2x4xf32>
    %c0_19 = arith.constant 0 : index
    %c0_20 = arith.constant 0 : index
    %42 = vector.load %arg9[%c0_19, %c0_20] : memref<2x4xf32, #tpu.memory_space<vmem>>, vector<2x4xf32>
    tpu.vector_store %arg9[%c0_19, %c0_20], %41 {strides = array<i32>} : memref<2x4xf32, #tpu.memory_space<vmem>>, vector<2x4xf32>,
    return
  }
  func.func @transform_0(%arg0: i32) -> (i32, i32) {
    %c0_i32 = arith.constant 0 : i32
    %c0_i32_0 = arith.constant 0 : i32
    return %arg0, %c0_i32 : i32, i32
  }
  func.func @transform_1(%arg0: i32) -> i32 {
    %c0_i32 = arith.constant 0 : i32
    %c0_i32_0 = arith.constant 0 : i32
    return %c0_i32 : i32
  }
  func.func @transform_2(%arg0: i32) -> i32 {
    %c0_i32 = arith.constant 0 : i32
    %c0_i32_0 = arith.constant 0 : i32
    return %c0_i32 : i32
  }
  func.func @transform_3(%arg0: i32) -> (i32, i32) {
    %c0_i32 = arith.constant 0 : i32
    %c0_i32_0 = arith.constant 0 : i32
    %c0_i32_1 = arith.constant 0 : i32
    return %c0_i32, %c0_i32_0 : i32, i32
  }
  func.func @transform_4(%arg0: i32) -> (i32, i32) {
    %c0_i32 = arith.constant 0 : i32
    %c0_i32_0 = arith.constant 0 : i32
    %c0_i32_1 = arith.constant 0 : i32
    return %c0_i32, %c0_i32_0 : i32, i32
  }
  func.func @transform_5(%arg0: i32) -> (i32, i32) {
    %c0_i32 = arith.constant 0 : i32
    %c0_i32_0 = arith.constant 0 : i32
    %c0_i32_1 = arith.constant 0 : i32
    return %c0_i32, %c0_i32_0 : i32, i32
  }
  func.func @transform_6(%arg0: i32) -> (i32, i32) {
    %c0_i32 = arith.constant 0 : i32
    %c0_i32_0 = arith.constant 0 : i32
    %c0_i32_1 = arith.constant 0 : i32
    return %c0_i32, %c0_i32_0 : i32, i32
  }
  func.func @transform_7(%arg0: i32) -> (i32, i32) {
    %c0_i32 = arith.constant 0 : i32
    %c0_i32_0 = arith.constant 0 : i32
    %c0_i32_1 = arith.constant 0 : i32
    return %c0_i32, %c0_i32_0 : i32, i32
  }
  func.func @transform_8(%arg0: i32) -> (i32, i32) {
    %c0_i32 = arith.constant 0 : i32
    %c0_i32_0 = arith.constant 0 : i32
    return %arg0, %c0_i32 : i32, i32
  }
}

</mosaic_0001>

<llo_original>
// kernel: net_forward.1
$region0: #{net_forward.1}
  #allocation0 [shape = 'u32[]', space=smem, size = 0x4, offset = 0x4, fixed_abs, tag = 'smem constant byte address 0x4 - core index']
  #allocation1 [shape = 'u32[144,128]{1,0:T(1,128)}', space=vmem, size = 0x12000, scoped, tag = 'internal scratch']
  %s0 = inlined_call_operand.vmem [shape: f32[2,18], index: 0, kind: input, shape index: {}]
  %s1 = inlined_call_operand.vmem [shape: f32[4], index: 1, kind: input, shape index: {}]
  %s2 = inlined_call_operand.vmem [shape: f32[2], index: 2, kind: input, shape index: {}]
  %s3 = inlined_call_operand.vmem [shape: f32[9,128], index: 3, kind: input, shape index: {}]
  %s4 = inlined_call_operand.vmem [shape: f32[9,128], index: 4, kind: input, shape index: {}]
  %s5 = inlined_call_operand.vmem [shape: f32[1,128], index: 5, kind: input, shape index: {}]
  %s6 = inlined_call_operand.vmem [shape: f32[128,4], index: 6, kind: input, shape index: {}]
  %s7 = inlined_call_operand.vmem [shape: f32[1,4], index: 7, kind: input, shape index: {}]
  %s8 = inlined_call_operand.hbm [shape: f32[2,4], index: 8, kind: output, shape index: {}]
  %s9 = sld [smem:[#allocation0]]
  $region50: #{net_forward.1} parent=0
    _
  %s11 = ssub.s32 1, %s9
  %s12 = scalar_select 0, %s11, %s9
  $region1: #{net_forward.1} parent=0
    #allocation2 [shape = 'u8[512]{0}', space=smem, size = 0x200, scoped, tag = 'input window, operand 1, single buffered']
    #allocation3 [shape = 's32[1]{0}', space=sflag, size = 0x4, scoped, tag = 'scoped memory for net_forward.1']
    #allocation4 [shape = 's32[1]{0}', space=sflag, size = 0x4, scoped, tag = 'scoped memory for net_forward.1']
    #allocation5 [shape = 'u8[512]{0}', space=smem, size = 0x200, scoped, tag = 'input window, operand 2, single buffered']
    #allocation6 [shape = 's32[1]{0}', space=sflag, size = 0x4, scoped, tag = 'scoped memory for net_forward.1']
    #allocation7 [shape = 'u8[1024]{0}', space=vmem, size = 0x400, scoped, tag = 'output window, operand 0, single buffered']
    %13 = vsyncpa [#allocation4], 0
    %14 = vsyncpa [#allocation6], 0
    %15 = vsyncpa [#allocation3], 0
    // Predicated region
    $region2: #{net_forward.1} parent=1 // pred_check
      _
    $region3: #{net_forward.1} parent=1 // pred_check_branch
      %17 = sbr.rel (0) target = $region5
    $region4: #{net_forward.1} parent=1 // pred_region
      _
    $region5: #{net_forward.1} parent=1 // pred_fallthru
      _
    // Predicated region
    $region6: #{net_forward.1} parent=1 // pred_check
      _
    $region7: #{net_forward.1} parent=1 // pred_check_branch
      %19 = sbr.rel (0) target = $region9
    $region8: #{net_forward.1} parent=1 // pred_region
      %s21 = ssub.s32 16, 16
      %22 = vsyncadd [#allocation4], %s21
      %s24 = sshll.u32 %s1, 4
      %s25 = int_to_ptr.vmem [resolvable:$true] %s24
      %27 = dma.vmem_to_smem %s25, 16, [#allocation2], [#allocation4]
    $region9: #{net_forward.1} parent=1 // pred_fallthru
      _
    // Predicated region
    $region10: #{net_forward.1} parent=1 // pred_check
      _
    $region11: #{net_forward.1} parent=1 // pred_check_branch
      %29 = sbr.rel (0) target = $region13
    $region12: #{net_forward.1} parent=1 // pred_region
      %s31 = ssub.s32 16, 16
      %32 = vsyncadd [#allocation6], %s31
      %s34 = sshll.u32 %s2, 4
      %s35 = int_to_ptr.vmem [resolvable:$true] %s34
      %37 = dma.vmem_to_smem %s35, 16, [#allocation5], [#allocation6]
    $region13: #{net_forward.1} parent=1 // pred_fallthru
      _
    // Predicated region
    $region14: #{net_forward.1} parent=1 // pred_check
      _
    $region15: #{net_forward.1} parent=1 // pred_check_branch
      %39 = sbr.rel (0) target = $region17
    $region16: #{net_forward.1} parent=1 // pred_region
      _
    $region17: #{net_forward.1} parent=1 // pred_fallthru
      _
    // Predicated region
    $region18: #{net_forward.1} parent=1 // pred_check
      _
    $region19: #{net_forward.1} parent=1 // pred_check_branch
      %41 = sbr.rel (0) target = $region21
    $region20: #{net_forward.1} parent=1 // pred_region
      _
    $region21: #{net_forward.1} parent=1 // pred_fallthru
      _
    // Predicated region
    $region22: #{net_forward.1} parent=1 // pred_check
      _
    $region23: #{net_forward.1} parent=1 // pred_check_branch
      %43 = sbr.rel (0) target = $region25
    $region24: #{net_forward.1} parent=1 // pred_region
      _
    $region25: #{net_forward.1} parent=1 // pred_fallthru
      _
    // Predicated region
    $region26: #{net_forward.1} parent=1 // pred_check
      _
    $region27: #{net_forward.1} parent=1 // pred_check_branch
      %45 = sbr.rel (0) target = $region29
    $region28: #{net_forward.1} parent=1 // pred_region
      _
    $region29: #{net_forward.1} parent=1 // pred_fallthru
      _
    // Predicated region
    $region30: #{net_forward.1} parent=1 // pred_check
      _
    $region31: #{net_forward.1} parent=1 // pred_check_branch
      %47 = sbr.rel (0) target = $region33
    $region32: #{net_forward.1} parent=1 // pred_region
      _
    $region33: #{net_forward.1} parent=1 // pred_fallthru
      _
    // Predicated region
    $region34: #{net_forward.1} parent=1 // pred_check
      _
    $region35: #{net_forward.1} parent=1 // pred_check_branch
      %49 = sbr.rel (0) target = $region37
    $region36: #{net_forward.1} parent=1 // pred_region
      %50 = dma.done [#allocation4], 16
    $region37: #{net_forward.1} parent=1 // pred_fallthru
      _
    // Predicated region
    $region38: #{net_forward.1} parent=1 // pred_check
      _
    $region39: #{net_forward.1} parent=1 // pred_check_branch
      %52 = sbr.rel (0) target = $region41
    $region40: #{net_forward.1} parent=1 // pred_region
      %53 = dma.done [#allocation6], 16
    $region41: #{net_forward.1} parent=1 // pred_fallthru
      _
    %54 = sfence
    %v55 = vld [vmem:[%s0] sm:$0x3]
    %s56 = sld [smem:[#allocation2]]
    %v57 = vstv %s56
    %v58 = vmul.f32 %v57, %v55
    %s59 = sld [smem:[#allocation2 + $0x1]]
    %v60 = vstv %s59
    %v61 = vmul.f32 %v60, %v55
    %63 = vrot.lane.b32.xlu0 %v61, 119
    %v64 = vpop.permute.xlu0 %63
    %v66 = vadd.f32 %v58, %v64
    %s67 = sld [smem:[#allocation5]]
    %v68 = vstv %s67
    %v69 = vadd.f32 %v66, %v68
    %v70 = vmax.f32 %v69, 0.0
    %s71 = sld [smem:[#allocation2 + $0x2]]
    %v72 = vstv %s71
    %v73 = vmul.f32 %v72, %v55
    %s74 = sld [smem:[#allocation2 + $0x3]]
    %v75 = vstv %s74
    %v76 = vmul.f32 %v75, %v55
    %78 = vrot.lane.b32.xlu0 %v76, 119
    %v79 = vpop.permute.xlu0 %78
    %v81 = vadd.f32 %v73, %v79
    %s82 = sld [smem:[#allocation5 + $0x1]]
    %v83 = vstv %s82
    %v84 = vadd.f32 %v81, %v83
    %v85 = vmax.f32 %v84, 0.0
    %v86 = vld [vmem:[%s3] sm:$0xff]
    %v87 = vld [vmem:[%s3 + $0x8] sm:$0x1]
    %v88 = vld [vmem:[%s4] sm:$0xff]
    %v89 = vld [vmem:[%s4 + $0x8] sm:$0x1]
    %vm90 = vcmask 72704
    %v92 = vsel %vm90, %v85, 0
    %vm94 = vcmask 1040384
    %v96 = vsel %vm94, %v89, 0
    %98 = vmatprep.subr.mxu0 0.0
    %99 = vmatpush1.msra.mxu0 %v88
    %100 = vmatprep.subr.mxu0 0.0
    %101 = vmatpush1.msra.mxu0 %v96
    %102 = vmatprep.subr.mxu0 0.0
    %103 = vmatpush1.msra.mxu0 0.0
    %104 = vmatprep.subr.mxu0 0.0
    %105 = vmatpush1.msra.mxu0 0.0
    %106 = vmatprep.subr.mxu0 0.0
    %107 = vmatpush1.msra.mxu0 0.0
    %108 = vmatprep.subr.mxu0 0.0
    %109 = vmatpush1.msra.mxu0 0.0
    %110 = vmatprep.subr.mxu0 0.0
    %111 = vmatpush1.msra.mxu0 0.0
    %112 = vmatprep.subr.mxu0 0.0
    %113 = vmatpush1.msra.mxu0 0.0
    %114 = vmatprep.subr.mxu0 0.0
    %115 = vmatpush1.msra.mxu0 0.0
    %116 = vmatprep.subr.mxu0 0.0
    %117 = vmatpush1.msra.mxu0 0.0
    %118 = vmatprep.subr.mxu0 0.0
    %119 = vmatpush1.msra.mxu0 0.0
    %120 = vmatprep.subr.mxu0 0.0
    %121 = vmatpush1.msra.mxu0 0.0
    %122 = vmatprep.subr.mxu0 0.0
    %123 = vmatpush1.msra.mxu0 0.0
    %124 = vmatprep.subr.mxu0 0.0
    %125 = vmatpush1.msra.mxu0 0.0
    %126 = vmatprep.subr.mxu0 0.0
    %127 = vmatpush1.msra.mxu0 0.0
    %128 = vmatprep.subr.mxu0 0.0
    %129 = vmatpush1.msra.mxu0 0.0
    %130 = vmatprep.subr.mxu0 0.0
    %131 = vmatpush1.msra.mxu0 0.0
    %132 = vmatprep.subr.mxu0 0.0
    %133 = vmatpush1.msra.mxu0 0.0
    %134 = vmatprep.subr.mxu0 0.0
    %135 = vmatpush1.msra.mxu0 0.0
    %136 = vmatprep.subr.mxu0 0.0
    %137 = vmatpush1.msra.mxu0 0.0
    %138 = vmatprep.subr.mxu0 0.0
    %139 = vmatpush1.msra.mxu0 0.0
    %140 = vmatprep.subr.mxu0 0.0
    %141 = vmatpush1.msra.mxu0 0.0
    %142 = vmatprep.subr.mxu0 0.0
    %143 = vmatpush1.msra.mxu0 0.0
    %144 = vmatprep.subr.mxu0 0.0
    %145 = vmatpush1.msra.mxu0 0.0
    %146 = vmatprep.subr.mxu0 0.0
    %147 = vmatpush1.msra.mxu0 0.0
    %148 = vmatprep.subr.mxu0 0.0
    %149 = vmatpush1.msra.mxu0 0.0
    %150 = vmatprep.subr.mxu0 0.0
    %151 = vmatpush1.msra.mxu0 0.0
    %152 = vmatprep.subr.mxu0 0.0
    %153 = vmatpush1.msra.mxu0 0.0
    %154 = vmatprep.subr.mxu0 0.0
    %155 = vmatpush1.msra.mxu0 0.0
    %156 = vmatprep.subr.mxu0 0.0
    %157 = vmatpush1.msra.mxu0 0.0
    %158 = vmatprep.subr.mxu0 0.0
    %159 = vmatpush1.msra.mxu0 0.0
    %160 = vmatprep.subr.mxu0 0.0
    %161 = vmatpush1.msra.mxu0 0.0
    %162 = vmatprep.mubr.f32.mxu0 0.0
    %163 = vmatmul.mubr.f32.gmra.mrb[0].mxu0 %v92
    %v164 = vpop.f32.mrb[0].mxu0
    %v165 = vadd.f32 0.0, %v164
    %v166 = vpop.f32.mrb[0].mxu0
    %167 = vdwg.mxu0
    %v169 = vsel %vm90, %v70, 0
    %v172 = vsel %vm94, %v87, 0
    %174 = vmatprep.subr.mxu0 0.0
    %175 = vmatpush1.msra.mxu0 %v86
    %176 = vmatprep.subr.mxu0 0.0
    %177 = vmatpush1.msra.mxu0 %v172
    %178 = vmatprep.subr.mxu0 0.0
    %179 = vmatpush1.msra.mxu0 0.0
    %180 = vmatprep.subr.mxu0 0.0
    %181 = vmatpush1.msra.mxu0 0.0
    %182 = vmatprep.subr.mxu0 0.0
    %183 = vmatpush1.msra.mxu0 0.0
    %184 = vmatprep.subr.mxu0 0.0
    %185 = vmatpush1.msra.mxu0 0.0
    %186 = vmatprep.subr.mxu0 0.0
    %187 = vmatpush1.msra.mxu0 0.0
    %188 = vmatprep.subr.mxu0 0.0
    %189 = vmatpush1.msra.mxu0 0.0
    %190 = vmatprep.subr.mxu0 0.0
    %191 = vmatpush1.msra.mxu0 0.0
    %192 = vmatprep.subr.mxu0 0.0
    %193 = vmatpush1.msra.mxu0 0.0
    %194 = vmatprep.subr.mxu0 0.0
    %195 = vmatpush1.msra.mxu0 0.0
    %196 = vmatprep.subr.mxu0 0.0
    %197 = vmatpush1.msra.mxu0 0.0
    %198 = vmatprep.subr.mxu0 0.0
    %199 = vmatpush1.msra.mxu0 0.0
    %200 = vmatprep.subr.mxu0 0.0
    %201 = vmatpush1.msra.mxu0 0.0
    %202 = vmatprep.subr.mxu0 0.0
    %203 = vmatpush1.msra.mxu0 0.0
    %204 = vmatprep.subr.mxu0 0.0
    %205 = vmatpush1.msra.mxu0 0.0
    %206 = vmatprep.subr.mxu0 0.0
    %207 = vmatpush1.msra.mxu0 0.0
    %208 = vmatprep.subr.mxu0 0.0
    %209 = vmatpush1.msra.mxu0 0.0
    %210 = vmatprep.subr.mxu0 0.0
    %211 = vmatpush1.msra.mxu0 0.0
    %212 = vmatprep.subr.mxu0 0.0
    %213 = vmatpush1.msra.mxu0 0.0
    %214 = vmatprep.subr.mxu0 0.0
    %215 = vmatpush1.msra.mxu0 0.0
    %216 = vmatprep.subr.mxu0 0.0
    %217 = vmatpush1.msra.mxu0 0.0
    %218 = vmatprep.subr.mxu0 0.0
    %219 = vmatpush1.msra.mxu0 0.0
    %220 = vmatprep.subr.mxu0 0.0
    %221 = vmatpush1.msra.mxu0 0.0
    %222 = vmatprep.subr.mxu0 0.0
    %223 = vmatpush1.msra.mxu0 0.0
    %224 = vmatprep.subr.mxu0 0.0
    %225 = vmatpush1.msra.mxu0 0.0
    %226 = vmatprep.subr.mxu0 0.0
    %227 = vmatpush1.msra.mxu0 0.0
    %228 = vmatprep.subr.mxu0 0.0
    %229 = vmatpush1.msra.mxu0 0.0
    %230 = vmatprep.subr.mxu0 0.0
    %231 = vmatpush1.msra.mxu0 0.0
    %232 = vmatprep.subr.mxu0 0.0
    %233 = vmatpush1.msra.mxu0 0.0
    %234 = vmatprep.subr.mxu0 0.0
    %235 = vmatpush1.msra.mxu0 0.0
    %236 = vmatprep.subr.mxu0 0.0
    %237 = vmatpush1.msra.mxu0 0.0
    %238 = vmatprep.mubr.f32.mxu0 0.0
    %239 = vmatmul.mubr.f32.gmra.mrb[0].mxu0 %v169
    %v240 = vpop.f32.mrb[0].mxu0
    %v241 = vadd.f32 %v165, %v240
    %v242 = vpop.f32.mrb[0].mxu0
    %243 = vdwg.mxu0
    %v244 = vld [vmem:[%s5] sm:$0x1]
    %v246 = vlaneseq
    %v247 = vshrl.u32 %v246, 7
    %v248 = vsub.s32 0, %v247
    %v249 = vrot.slane %v244, %v248
    %v251 = vadd.f32 %v241, %v249
    %v252 = vmax.f32 %v251, 0.0
    %v253 = vld [vmem:[%s6] sm:$0xff]
    %v254 = vld [vmem:[%s6 + $0x8] sm:$0xff]
    %v255 = vld [vmem:[%s6 + $0x10] sm:$0xff]
    %v256 = vld [vmem:[%s6 + $0x18] sm:$0xff]
    %v257 = vld [vmem:[%s6 + $0x20] sm:$0xff]
    %v258 = vld [vmem:[%s6 + $0x28] sm:$0xff]
    %v259 = vld [vmem:[%s6 + $0x30] sm:$0xff]
    %v260 = vld [vmem:[%s6 + $0x38] sm:$0xff]
    %v261 = vld [vmem:[%s6 + $0x40] sm:$0xff]
    %v262 = vld [vmem:[%s6 + $0x48] sm:$0xff]
    %v263 = vld [vmem:[%s6 + $0x50] sm:$0xff]
    %v264 = vld [vmem:[%s6 + $0x58] sm:$0xff]
    %v265 = vld [vmem:[%s6 + $0x60] sm:$0xff]
    %v266 = vld [vmem:[%s6 + $0x68] sm:$0xff]
    %v267 = vld [vmem:[%s6 + $0x70] sm:$0xff]
    %v268 = vld [vmem:[%s6 + $0x78] sm:$0xff]
    %v269 = vld [vmem:[%s7] sm:$0x1]
    %v271 = vlaneseq
    %v272 = vshrl.u32 %v271, 7
    %v273 = vsub.s32 0, %v272
    %v274 = vrot.slane %v269, %v273
    %276 = vmatprep.subr.mxu0 0.0
    %277 = vmatpush1.msra.mxu0 %v253
    %278 = vmatprep.subr.mxu0 0.0
    %279 = vmatpush1.msra.mxu0 %v254
    %280 = vmatprep.subr.mxu0 0.0
    %281 = vmatpush1.msra.mxu0 %v255
    %282 = vmatprep.subr.mxu0 0.0
    %283 = vmatpush1.msra.mxu0 %v256
    %284 = vmatprep.subr.mxu0 0.0
    %285 = vmatpush1.msra.mxu0 %v257
    %286 = vmatprep.subr.mxu0 0.0
    %287 = vmatpush1.msra.mxu0 %v258
    %288 = vmatprep.subr.mxu0 0.0
    %289 = vmatpush1.msra.mxu0 %v259
    %290 = vmatprep.subr.mxu0 0.0
    %291 = vmatpush1.msra.mxu0 %v260
    %292 = vmatprep.subr.mxu0 0.0
    %293 = vmatpush1.msra.mxu0 %v261
    %294 = vmatprep.subr.mxu0 0.0
    %295 = vmatpush1.msra.mxu0 %v262
    %296 = vmatprep.subr.mxu0 0.0
    %297 = vmatpush1.msra.mxu0 %v263
    %298 = vmatprep.subr.mxu0 0.0
    %299 = vmatpush1.msra.mxu0 %v264
    %300 = vmatprep.subr.mxu0 0.0
    %301 = vmatpush1.msra.mxu0 %v265
    %302 = vmatprep.subr.mxu0 0.0
    %303 = vmatpush1.msra.mxu0 %v266
    %304 = vmatprep.subr.mxu0 0.0
    %305 = vmatpush1.msra.mxu0 %v267
    %306 = vmatprep.subr.mxu0 0.0
    %307 = vmatpush1.msra.mxu0 %v268
    %308 = vmatprep.subr.mxu0 0.0
    %309 = vmatpush1.msra.mxu0 0.0
    %310 = vmatprep.subr.mxu0 0.0
    %311 = vmatpush1.msra.mxu0 0.0
    %312 = vmatprep.subr.mxu0 0.0
    %313 = vmatpush1.msra.mxu0 0.0
    %314 = vmatprep.subr.mxu0 0.0
    %315 = vmatpush1.msra.mxu0 0.0
    %316 = vmatprep.subr.mxu0 0.0
    %317 = vmatpush1.msra.mxu0 0.0
    %318 = vmatprep.subr.mxu0 0.0
    %319 = vmatpush1.msra.mxu0 0.0
    %320 = vmatprep.subr.mxu0 0.0
    %321 = vmatpush1.msra.mxu0 0.0
    %322 = vmatprep.subr.mxu0 0.0
    %323 = vmatpush1.msra.mxu0 0.0
    %324 = vmatprep.subr.mxu0 0.0
    %325 = vmatpush1.msra.mxu0 0.0
    %326 = vmatprep.subr.mxu0 0.0
    %327 = vmatpush1.msra.mxu0 0.0
    %328 = vmatprep.subr.mxu0 0.0
    %329 = vmatpush1.msra.mxu0 0.0
    %330 = vmatprep.subr.mxu0 0.0
    %331 = vmatpush1.msra.mxu0 0.0
    %332 = vmatprep.subr.mxu0 0.0
    %333 = vmatpush1.msra.mxu0 0.0
    %334 = vmatprep.subr.mxu0 0.0
    %335 = vmatpush1.msra.mxu0 0.0
    %336 = vmatprep.subr.mxu0 0.0
    %337 = vmatpush1.msra.mxu0 0.0
    %338 = vmatprep.subr.mxu0 0.0
    %339 = vmatpush1.msra.mxu0 0.0
    %340 = vmatprep.mubr.f32.mxu0 0.0
    %341 = vmatmul.mubr.f32.gmra.mrb[0].mxu0 %v252
    %v342 = vpop.f32.mrb[0].mxu0
    %v343 = vadd.f32 %v274, %v342
    %v344 = vpop.f32.mrb[0].mxu0
    %345 = vdwg.mxu0
    %vm346 = vcmask 25600
    %347 = vst.msk [vmem:[#allocation7] sm:$0x3] %vm346, %v343
    // Predicated region
    $region42: #{net_forward.1} parent=1 // pred_check
      _
    $region43: #{net_forward.1} parent=1 // pred_check_branch
      %349 = sbr.rel (0) target = $region45
    $region44: #{net_forward.1} parent=1 // pred_region
      %s351 = ssub.s32 32, 32
      %352 = vsyncadd [#allocation3], %s351
      %s354 = sshll.u32 [#allocation7], 4
      %s355 = int_to_ptr.vmem [resolvable:$true] %s354
      %357 = dma.vmem_to_hbm [thread:$0]  %s355, 32, %s8, [#allocation3]
    $region45: #{net_forward.1} parent=1 // pred_fallthru
      _
    // Predicated region
    $region46: #{net_forward.1} parent=1 // pred_check
      _
    $region47: #{net_forward.1} parent=1 // pred_check_branch
      %359 = sbr.rel (0) target = $region49
    $region48: #{net_forward.1} parent=1 // pred_region
      %360 = dma.done [#allocation3], 32
    $region49: #{net_forward.1} parent=1 // pred_fallthru
      _
    %361 = vsyncpa [#allocation3], 1
    %362 = vsyncpa [#allocation4], 1
    %363 = vsyncpa [#allocation6], 1

</llo_original>
